<compile_context>
chip_gen: v5e
topology: v5e:2x2
jax: 0.10.0
libtpu: 0.0.40
codegen_flags: <defaults>
</compile_context>

<pallas_src>
import functools

import jax
import jax.numpy as jnp
from jax.experimental import pallas as pl
from jax.experimental.pallas import tpu as pltpu


def _round_up(x, m):
    return (x + m - 1) // m * m


def _sigmoid(x, approx):
    # 1 / (1 + exp(-x)): exp on the EUP; reciprocal also on the EUP when approx=True.
    return pl.reciprocal(1.0 + jnp.exp(-x), approx=approx)


# ----------------------------- Pallas kernel ------------------------------- #

def _sentence_encoder_gru_kernel(
    # scalar prefetch (SMEM)
    tile_len_ref,                 # (num_tiles,) int32 : max seq len per batch tile
    # inputs (VMEM)
    x_ref,                        # (T*Bt, E)  time-major rows inside tile: t*Bt + b
    len_ref,                      # (Bt, 1)    int32 per-row sequence lengths
    w1_ref, b1_ref,               # (E, Ip), (1, Ip)
    wih_ref, gxb_ref,             # (Ip, 3Hp), (1, 3Hp)  packed [r|z|n], each gate at a
    whh_ref, ghb_ref,             # (Hp, 3Hp), (1, 3Hp)  128-lane boundary (Hp-wide)
    w2_ref, b2_ref,               # (Hp, Op), (1, Op)
    # outputs
    out_ref,                      # (T*Bt, Op)  lane-dense (Op multiple of 128)
    # scratch
    gx_ref,                       # VMEM (T*Bt, 3Hp) f32 : precomputed input-side gates
    gru_ref,                      # VMEM (T*Bt, Hp)  f32 : padded GRU outputs
    h_ref,                        # VMEM (Bt, Hp)    f32 : hidden state
    *, block_b, hidden_pad, use_bf16,
):
    Bt, Hp = block_b, hidden_pad
    t_max = tile_len_ref[pl.program_id(0)]
    mm_dtype = jnp.bfloat16 if use_bf16 else jnp.float32

    # ---- bulk MXU work over all timesteps at once -------------------------- #
    # h1 = ReLU(x @ W1 + b1); x/W1 already in mm_dtype (pre-cast in the wrapper).
    h1 = jnp.maximum(
        jnp.dot(x_ref[...], w1_ref[...], preferred_element_type=jnp.float32)
        + b1_ref[...], 0.0)
    # fused input-side gate pre-activations, hidden r/z biases folded in -> VMEM scratch
    gx_ref[...] = jnp.dot(h1.astype(mm_dtype), wih_ref[...],
                          preferred_element_type=jnp.float32) + gxb_ref[...]

    # padded timesteps / padded batch rows stay 0 (pad_packed_sequence behaviour)
    gru_ref[...] = jnp.zeros_like(gru_ref)
    h_ref[...] = jnp.zeros_like(h_ref)

    lens = len_ref[...]                     # [Bt, 1] int32
    whh = whh_ref[...]                      # [Hp, 3Hp] (bf16 on the perf path)
    ghb = ghb_ref[...]                      # [1, 3Hp] f32

    # ---- GRU recurrence, batched over Bt rows, bounded by tile max length --- #
    # TODO(synk): pl.loop(..., unroll=2) / fori_loop unrolling could overlap the gxt load
    # and gru store of step t with step t+1's recurrent matmul; left off for safety.
    @pl.loop(0, t_max)
    def _(t):
        row = pl.multiple_of(t * Bt, Bt)
        gxt = gx_ref[pl.ds(row, Bt), :]                        # [Bt, 3Hp]
        h = h_ref[...]                                         # [Bt, Hp] f32
        # bf16 operands, f32 accumulation on the latency-critical recurrent matmul.
        gh = jnp.dot(h.astype(whh.dtype), whh,
                     preferred_element_type=jnp.float32) + ghb
        # one fused sigmoid over the contiguous, lane-aligned r|z block
        rz = _sigmoid(gxt[:, : 2 * Hp] + gh[:, : 2 * Hp], approx=use_bf16)
        r = rz[:, :Hp]
        z = rz[:, Hp:]
        n = jnp.tanh(gxt[:, 2 * Hp:] + r * gh[:, 2 * Hp:])
        h_new = (1.0 - z) * n + z * h
        valid = t < lens                                       # [Bt, 1], monotone in t
        gru_ref[pl.ds(row, Bt), :] = jnp.where(valid, h_new, 0.0)
        # No masking on h: once invalid, a row never emits again and the final hidden
        # state is not an output of this module (invariant documented at top of file).
        h_ref[...] = h_new

    # ---- output linear on the zero-padded GRU outputs (lane-dense Op store) -- #
    out_ref[...] = (
        jnp.dot(gru_ref[...].astype(mm_dtype), w2_ref[...],
                preferred_element_type=jnp.float32) + b2_ref[...]
    ).astype(out_ref.dtype)


# ------------------------------- wrapper ------------------------------------ #

def sentence_encoder_gru(lang_feat, lang_len, params, *, block_b=64, use_bf16=True):
    """Pallas forward of SentenceEncoderGRU. Returns (output, lang_len)."""
    B, T, E = lang_feat.shape
    w1, b1 = params["w1"], params["b1"]          # (I, E), (I,)
    wih, whh = params["wih"], params["whh"]      # (3H, I), (3H, H)
    bih, bhh = params["bih"], params["bhh"]      # (3H,), (3H,)
    w2, b2 = params["w2"], params["b2"]          # (O, H), (O,)
    I = w1.shape[0]
    H = whh.shape[1]
    O = w2.shape[0]
    Ip = _round_up(I, 128)      # lane-pad MLP width
    Hp = _round_up(H, 128)      # lane-pad hidden width (gate slices hit vreg boundaries)
    Op = _round_up(O, 128)      # lane-dense output store
    G = 3 * Hp

    in_dt = jnp.bfloat16 if use_bf16 else jnp.float32
    in_bytes = 2 if use_bf16 else 4

    # --- batch tile: as large as the (padded) batch allows; shrink if VMEM tight --- #
    B8 = _round_up(max(B, 1), 8)
    Bt = max(8, min(_round_up(block_b, 8), B8))

    def vmem_estimate(bt):
        x_tile = T * bt * E * in_bytes * 2                 # double-buffered input
        lens_tile = bt * 4 * 2
        w_bytes = (E * Ip + Ip * G + Hp * G + Hp * Op) * in_bytes * 2
        bias_bytes = (Ip + 2 * G + Op) * 4 * 2
        out_tile = T * bt * Op * 4 * 2
        scratch = (T * bt * G + T * bt * Hp + bt * Hp) * 4
        return x_tile + lens_tile + w_bytes + bias_bytes + out_tile + scratch

    # v7x has only 64 MiB physical VMEM -> keep the footprint comfortably below it.
    while vmem_estimate(Bt) > (44 << 20) and Bt > 8:
        Bt = max(8, (Bt // 2) // 8 * 8)
    # TODO(synk): for very large T on v7x, additionally chunk the gx/gru scratch over the
    # time axis (emit_pipeline over T-chunks) instead of only shrinking Bt.

    num_tiles = pl.cdiv(B8, Bt)
    B_pad = num_tiles * Bt
    vmem_limit = int(min(max(int(vmem_estimate(Bt) * 1.4) + (4 << 20), 32 << 20), 96 << 20))

    lens = lang_len.astype(jnp.int32)
    lens_pad = jnp.pad(lens, (0, B_pad - B))               # padded rows -> length 0
    feat_pad = jnp.pad(lang_feat.astype(in_dt), ((0, B_pad - B), (0, 0), (0, 0)))

    # TODO(synk): this time-major repack (and the matching output un-pack) is an extra
    # HBM round trip; removing it needs sublane-strided dynamic per-step loads/stores on
    # a batch-major gx/gru scratch, left out of this version for lowering safety.
    x_flat = (feat_pad.reshape(num_tiles, Bt, T, E)
              .transpose(0, 2, 1, 3)
              .reshape(num_tiles * T * Bt, E))
    lens_col = lens_pad.reshape(B_pad, 1)
    tile_len = jnp.minimum(
        jnp.max(lens_pad.reshape(num_tiles, Bt), axis=1), T).astype(jnp.int32)

    # --- packed / lane-padded / pre-transposed weights, PyTorch gate order (r,z,n) --- #
    f32 = jnp.float32
    w1_p = jnp.zeros((E, Ip), f32).at[:, :I].set(w1.T.astype(f32))
    b1_p = jnp.zeros((1, Ip), f32).at[0, :I].set(b1.astype(f32))

    wih_p = jnp.zeros((Ip, G), f32)
    whh_p = jnp.zeros((Hp, G), f32)
    gxb = jnp.zeros((1, G), f32)    # input-side bias + foldable hidden r/z biases
    ghb = jnp.zeros((1, G), f32)    # hidden-side bias for n only (stays inside r*(...))
    for g in range(3):
        c0 = g * Hp
        wih_p = wih_p.at[:I, c0:c0 + H].set(wih[g * H:(g + 1) * H, :].T.astype(f32))
        whh_p = whh_p.at[:H, c0:c0 + H].set(whh[g * H:(g + 1) * H, :].T.astype(f32))
        gate_bias = bih[g * H:(g + 1) * H] + (bhh[g * H:(g + 1) * H] if g < 2 else 0.0)
        gxb = gxb.at[0, c0:c0 + H].set(gate_bias.astype(f32))
        if g == 2:
            ghb = ghb.at[0, c0:c0 + H].set(bhh[g * H:(g + 1) * H].astype(f32))

    w2_p = jnp.zeros((Hp, Op), f32).at[:H, :O].set(w2.T.astype(f32))
    b2_p = jnp.zeros((1, Op), f32).at[0, :O].set(b2.astype(f32))

    # Pre-cast matmul operands in the wrapper (halves weight DMA bytes / VMEM and removes
    # per-grid-step casts).  Biases stay f32 (added into f32 accumulators).
    w1_p = w1_p.astype(in_dt)
    wih_p = wih_p.astype(in_dt)
    whh_p = whh_p.astype(in_dt)     # recurrent matmul: bf16 operands, f32 accumulation
    w2_p = w2_p.astype(in_dt)

    kernel = functools.partial(_sentence_encoder_gru_kernel,
                               block_b=Bt, hidden_pad=Hp, use_bf16=use_bf16)

    def tile_spec(shape):
        return pl.BlockSpec(shape, lambda i, tl: (i, 0))

    def rep_spec(shape):
        return pl.BlockSpec(shape, lambda i, tl: (0, 0))
    # TODO(synk): grid-invariant weight specs could use pipeline_mode=pl.Buffered(1) to
    # drop their second VMEM buffer; kept at the default double-buffering for safety.

    out_flat = pl.pallas_call(
        kernel,
        out_shape=jax.ShapeDtypeStruct((num_tiles * T * Bt, Op), jnp.float32),
        grid_spec=pltpu.PrefetchScalarGridSpec(
            num_scalar_prefetch=1,
            grid=(num_tiles,),
            in_specs=[
                tile_spec((T * Bt, E)),                    # lang_feat (time-major per tile)
                tile_spec((Bt, 1)),                        # per-row lengths
                rep_spec((E, Ip)), rep_spec((1, Ip)),      # W1, b1
                rep_spec((Ip, G)), rep_spec((1, G)),       # packed W_ih, folded input bias
                rep_spec((Hp, G)), rep_spec((1, G)),       # packed W_hh, hidden-n bias
                rep_spec((Hp, Op)), rep_spec((1, Op)),     # W2, b2 (lane-padded)
            ],
            out_specs=tile_spec((T * Bt, Op)),
            scratch_shapes=[
                pltpu.VMEM((T * Bt, G), jnp.float32),      # precomputed input gates
                pltpu.VMEM((T * Bt, Hp), jnp.float32),     # padded GRU outputs
                pltpu.VMEM((Bt, Hp), jnp.float32),         # hidden state
            ],
        ),
        compiler_params=pltpu.CompilerParams(
            dimension_semantics=("parallel",),             # batch tiles independent
            vmem_limit_bytes=vmem_limit,
        ),
    )(tile_len, x_flat, lens_col,
      w1_p, b1_p, wih_p, gxb, whh_p, ghb, w2_p, b2_p)

    out = (out_flat.reshape(num_tiles, T, Bt, Op)[..., :O]
           .transpose(0, 2, 1, 3)
           .reshape(B_pad, T, O)[:B])
    return out, lang_len


# --------------------------- params + reference ----------------------------- #

def init_params(key, embedding_size, input_size, hidden_size, output_size):
    ks = jax.random.split(key, 8)
    s1 = 1.0 / jnp.sqrt(embedding_size)
    sg = 1.0 / jnp.sqrt(hidden_size)
    s2 = 1.0 / jnp.sqrt(hidden_size)
    u = lambda k, shape, s: jax.random.uniform(k, shape, jnp.float32, -s, s)
    return {
        "w1": u(ks[0], (input_size, embedding_size), s1),
        "b1": u(ks[1], (input_size,), s1),
        "wih": u(ks[2], (3 * hidden_size, input_size), sg),
        "whh": u(ks[3], (3 * hidden_size, hidden_size), sg),
        "bih": u(ks[4], (3 * hidden_size,), sg),
        "bhh": u(ks[5], (3 * hidden_size,), sg),
        "w2": u(ks[6], (output_size, hidden_size), s2),
        "b2": u(ks[7], (output_size,), s2),
    }


def reference_forward(lang_feat, lang_len, p):
    """Pure-JAX (f32) mirror of the PyTorch forward, for correctness checking."""
    H = p["whh"].shape[1]
    h1 = jax.nn.relu(jnp.einsum("bte,ie->bti", lang_feat, p["w1"]) + p["b1"])
    B, T, _ = h1.shape
    h = jnp.zeros((B, H), jnp.float32)
    outs = []
    for t in range(T):
        xt = h1[:, t]
        gx = xt @ p["wih"].T + p["bih"]
        gh = h @ p["whh"].T + p["bhh"]
        r = jax.nn.sigmoid(gx[:, :H] + gh[:, :H])
        z = jax.nn.sigmoid(gx[:, H:2 * H] + gh[:, H:2 * H])
        n = jnp.tanh(gx[:, 2 * H:] + r * gh[:, 2 * H:])
        h_new = (1.0 - z) * n + z * h
        valid = (t < lang_len)[:, None]
        h = jnp.where(valid, h_new, h)
        outs.append(jnp.where(valid, h_new, 0.0))
    gru_out = jnp.stack(outs, axis=1)
    return gru_out @ p["w2"].T + p["b2"]


# --------------------------------- main ------------------------------------- #

if __name__ == "__main__":
    # Small shapes consistent with the module's forward:
    #   lang_feat: [B, T, embedding], lang_len: [B]
    B, T = 2, 8
    EMB, INP, HID, OUT = 32, 32, 32, 16

    key = jax.random.PRNGKey(0)
    k_feat, k_param = jax.random.split(key)

    lang_feat = jax.random.normal(k_feat, (B, T, EMB), jnp.float32)
    lang_len = jnp.array([T, 5], dtype=jnp.int32)     # variable lengths (<= T)

    params = init_params(k_param, EMB, INP, HID, OUT)
    ref = reference_forward(lang_feat, lang_len, params)

    # 1) f32 path (exact sigmoid, f32 matmuls): strict check vs the PyTorch-equivalent ref.
    out_f32, _ = sentence_encoder_gru(lang_feat, lang_len, params, use_bf16=False)
    out_f32 = jax.block_until_ready(out_f32)
    assert out_f32.shape == (B, T, OUT)
    assert jnp.allclose(out_f32, ref, atol=1e-4, rtol=1e-4), "f32 path mismatch vs reference"

    # 2) bf16 perf path (bf16 operands incl. recurrence, approx EUP sigmoid): loose sanity.
    out_bf16, lens_out = sentence_encoder_gru(lang_feat, lang_len, params, use_bf16=True)
    out_bf16 = jax.block_until_ready(out_bf16)
    max_err = float(jnp.max(jnp.abs(out_bf16 - ref)))
    assert out_bf16.shape == (B, T, OUT)
    assert max_err < 2e-1, f"bf16 path error too large: {max_err}"

    print("KERNEL_OK")
</pallas_src>

<mosaic_0001>
module attributes {stable_mosaic.version = 11 : i64} {
  func.func @_sentence_encoder_gru_kernel(%arg0: i32, %arg1: memref<1xi32, #tpu.memory_space<smem>>, %arg2: memref<64x32xf32, #tpu.memory_space<vmem>>, %arg3: memref<8x1xi32, #tpu.memory_space<vmem>>, %arg4: memref<32x128xf32, #tpu.memory_space<vmem>>, %arg5: memref<1x128xf32, #tpu.memory_space<vmem>>, %arg6: memref<128x384xf32, #tpu.memory_space<vmem>>, %arg7: memref<1x384xf32, #tpu.memory_space<vmem>>, %arg8: memref<128x384xf32, #tpu.memory_space<vmem>>, %arg9: memref<1x384xf32, #tpu.memory_space<vmem>>, %arg10: memref<128x128xf32, #tpu.memory_space<vmem>>, %arg11: memref<1x128xf32, #tpu.memory_space<vmem>>, %arg12: memref<64x128xf32, #tpu.memory_space<vmem>>, %arg13: memref<64x384xf32, #tpu.memory_space<vmem>>, %arg14: memref<64x128xf32, #tpu.memory_space<vmem>>, %arg15: memref<8x128xf32, #tpu.memory_space<vmem>>) attributes {dimension_semantics = [#tpu.dimension_semantics<parallel>], iteration_bounds = array<i64: 1>, scalar_prefetch = 1 : i64, scratch_operands = 3 : i64, tpu.core_type = #tpu.core_type<tc>, window_params = [{transform_indices = @transform_0, window_bounds = array<i64: 64, 32>}, {transform_indices = @transform_1, window_bounds = array<i64: 8, 1>}, {pipeline_mode = #tpu.pipeline_mode<synchronous>, transform_indices = @transform_2, window_bounds = array<i64: 32, 128>}, {pipeline_mode = #tpu.pipeline_mode<synchronous>, transform_indices = @transform_3, window_bounds = array<i64: 1, 128>}, {pipeline_mode = #tpu.pipeline_mode<synchronous>, transform_indices = @transform_4, window_bounds = array<i64: 128, 384>}, {pipeline_mode = #tpu.pipeline_mode<synchronous>, transform_indices = @transform_5, window_bounds = array<i64: 1, 384>}, {pipeline_mode = #tpu.pipeline_mode<synchronous>, transform_indices = @transform_6, window_bounds = array<i64: 128, 384>}, {pipeline_mode = #tpu.pipeline_mode<synchronous>, transform_indices = @transform_7, window_bounds = array<i64: 1, 384>}, {pipeline_mode = #tpu.pipeline_mode<synchronous>, transform_indices = @transform_8, window_bounds = array<i64: 128, 128>}, {pipeline_mode = #tpu.pipeline_mode<synchronous>, transform_indices = @transform_9, window_bounds = array<i64: 1, 128>}, {transform_indices = @transform_10, window_bounds = array<i64: 64, 128>}]} {
    %0 = arith.index_cast %arg0 : i32 to index
    %1 = memref.load %arg1[%0] : memref<1xi32, #tpu.memory_space<smem>>
    %c0 = arith.constant 0 : index
    %c0_0 = arith.constant 0 : index
    %2 = vector.load %arg2[%c0, %c0_0] : memref<64x32xf32, #tpu.memory_space<vmem>>, vector<64x32xf32>
    %c0_1 = arith.constant 0 : index
    %c0_2 = arith.constant 0 : index
    %3 = vector.load %arg4[%c0_1, %c0_2] : memref<32x128xf32, #tpu.memory_space<vmem>>, vector<32x128xf32>
    %cst = arith.constant dense<0.000000e+00> : vector<64x128xf32>
    %4 = tpu.matmul %2, %3, %cst {dimension_numbers = #tpu.dot_dimension_numbers<[1], [0], [0], [1], [0, 0, 1, 1], [], []>} : vector<64x32xf32>, vector<32x128xf32>, vector<64x128xf32> -> vector<64x128xf32>
    %c0_3 = arith.constant 0 : index
    %c0_4 = arith.constant 0 : index
    %5 = vector.load %arg5[%c0_3, %c0_4] : memref<1x128xf32, #tpu.memory_space<vmem>>, vector<1x128xf32>
    %6 = vector.broadcast %5 : vector<1x128xf32> to vector<64x128xf32>
    %7 = arith.addf %4, %6 : vector<64x128xf32>
    %cst_5 = arith.constant 0.000000e+00 : f32
    %8 = vector.broadcast %cst_5 : f32 to vector<64x128xf32>
    %9 = arith.maximumf %7, %8 : vector<64x128xf32>
    %c0_6 = arith.constant 0 : index
    %c0_7 = arith.constant 0 : index
    %10 = vector.load %arg6[%c0_6, %c0_7] : memref<128x384xf32, #tpu.memory_space<vmem>>, vector<128x384xf32>
    %cst_8 = arith.constant dense<0.000000e+00> : vector<64x384xf32>
    %11 = tpu.matmul %9, %10, %cst_8 {dimension_numbers = #tpu.dot_dimension_numbers<[1], [0], [0], [1], [0, 0, 1, 1], [], []>} : vector<64x128xf32>, vector<128x384xf32>, vector<64x384xf32> -> vector<64x384xf32>
    %c0_9 = arith.constant 0 : index
    %c0_10 = arith.constant 0 : index
    %12 = vector.load %arg7[%c0_9, %c0_10] : memref<1x384xf32, #tpu.memory_space<vmem>>, vector<1x384xf32>
    %13 = vector.broadcast %12 : vector<1x384xf32> to vector<64x384xf32>
    %14 = arith.addf %11, %13 : vector<64x384xf32>
    %c0_11 = arith.constant 0 : index
    %c0_12 = arith.constant 0 : index
    %15 = vector.load %arg13[%c0_11, %c0_12] : memref<64x384xf32, #tpu.memory_space<vmem>>, vector<64x384xf32>
    tpu.vector_store %arg13[%c0_11, %c0_12], %14 {strides = array<i32>} : memref<64x384xf32, #tpu.memory_space<vmem>>, vector<64x384xf32>,
    %cst_13 = arith.constant 0.000000e+00 : f32
    %16 = vector.broadcast %cst_13 : f32 to vector<64x128xf32>
    %c0_14 = arith.constant 0 : index
    %c0_15 = arith.constant 0 : index
    %17 = vector.load %arg14[%c0_14, %c0_15] : memref<64x128xf32, #tpu.memory_space<vmem>>, vector<64x128xf32>
    tpu.vector_store %arg14[%c0_14, %c0_15], %16 {strides = array<i32>} : memref<64x128xf32, #tpu.memory_space<vmem>>, vector<64x128xf32>,
    %cst_16 = arith.constant 0.000000e+00 : f32
    %18 = vector.broadcast %cst_16 : f32 to vector<8x128xf32>
    %c0_17 = arith.constant 0 : index
    %c0_18 = arith.constant 0 : index
    %19 = vector.load %arg15[%c0_17, %c0_18] : memref<8x128xf32, #tpu.memory_space<vmem>>, vector<8x128xf32>
    tpu.vector_store %arg15[%c0_17, %c0_18], %18 {strides = array<i32>} : memref<8x128xf32, #tpu.memory_space<vmem>>, vector<8x128xf32>,
    %c0_19 = arith.constant 0 : index
    %c0_20 = arith.constant 0 : index
    %20 = vector.load %arg3[%c0_19, %c0_20] : memref<8x1xi32, #tpu.memory_space<vmem>>, vector<8x1xi32>
    %c0_21 = arith.constant 0 : index
    %c0_22 = arith.constant 0 : index
    %21 = vector.load %arg8[%c0_21, %c0_22] : memref<128x384xf32, #tpu.memory_space<vmem>>, vector<128x384xf32>
    %c0_23 = arith.constant 0 : index
    %c0_24 = arith.constant 0 : index
    %22 = vector.load %arg9[%c0_23, %c0_24] : memref<1x384xf32, #tpu.memory_space<vmem>>, vector<1x384xf32>
    %c0_i32 = arith.constant 0 : i32
    %23 = arith.subi %1, %c0_i32 : i32
    %c1_i32 = arith.constant 1 : i32
    %c1_i32_25 = arith.constant 1 : i32
    %24 = arith.subi %c1_i32, %c1_i32_25 : i32
    %25 = arith.addi %23, %24 : i32
    %c1_i32_26 = arith.constant 1 : i32
    %26 = arith.divsi %25, %c1_i32_26 : i32
    %c1_i32_27 = arith.constant 1 : i32
    %c0_i32_28 = arith.constant 0 : i32
    %c0_i32_29 = arith.constant 0 : i32
    %27 = arith.subi %26, %c0_i32_29 : i32
    %28 = arith.addi %c0_i32_29, %27 : i32
    %c1_i32_30 = arith.constant 1 : i32
    scf.for %arg16 = %c0_i32_29 to %28 step %c1_i32_30  : i32 {
      %36 = arith.muli %arg16, %c1_i32_27 : i32
      %37 = arith.addi %c0_i32_28, %36 : i32
      %c8_i32 = arith.constant 8 : i32
      %38 = arith.muli %37, %c8_i32 : i32
      %39 = tpu.assume_multiple %38, 8 : i32
      %40 = arith.index_cast %39 : i32 to index
      %c0_40 = arith.constant 0 : index
      %41 = vector.load %arg13[%40, %c0_40] : memref<64x384xf32, #tpu.memory_space<vmem>>, vector<8x384xf32>
      %c0_41 = arith.constant 0 : index
      %c0_42 = arith.constant 0 : index
      %42 = vector.load %arg15[%c0_41, %c0_42] : memref<8x128xf32, #tpu.memory_space<vmem>>, vector<8x128xf32>
      %cst_43 = arith.constant dense<0.000000e+00> : vector<8x384xf32>
      %43 = tpu.matmul %42, %21, %cst_43 {dimension_numbers = #tpu.dot_dimension_numbers<[1], [0], [0], [1], [0, 0, 1, 1], [], []>} : vector<8x128xf32>, vector<128x384xf32>, vector<8x384xf32> -> vector<8x384xf32>
      %44 = vector.broadcast %22 : vector<1x384xf32> to vector<8x384xf32>
      %45 = arith.addf %43, %44 : vector<8x384xf32>
      %46 = vector.extract_strided_slice %41 {offsets = [0, 0], sizes = [8, 256], strides = [1, 1]} : vector<8x384xf32> to vector<8x256xf32>
      %47 = vector.extract_strided_slice %45 {offsets = [0, 0], sizes = [8, 256], strides = [1, 1]} : vector<8x384xf32> to vector<8x256xf32>
      %48 = arith.addf %46, %47 : vector<8x256xf32>
      %cst_44 = arith.constant 0.000000e+00 : f32
      %49 = vector.broadcast %cst_44 : f32 to vector<8x256xf32>
      %50 = arith.subf %49, %48 : vector<8x256xf32>
      %51 = math.exp %50 : vector<8x256xf32>
      %cst_45 = arith.constant 1.000000e+00 : f32
      %52 = vector.broadcast %cst_45 : f32 to vector<8x256xf32>
      %53 = arith.addf %52, %51 : vector<8x256xf32>
      %54 = tpu.reciprocal %53 : vector<8x256xf32> -> vector<8x256xf32>
      %55 = vector.extract_strided_slice %54 {offsets = [0, 0], sizes = [8, 128], strides = [1, 1]} : vector<8x256xf32> to vector<8x128xf32>
      %56 = vector.extract_strided_slice %54 {offsets = [0, 128], sizes = [8, 128], strides = [1, 1]} : vector<8x256xf32> to vector<8x128xf32>
      %57 = vector.extract_strided_slice %41 {offsets = [0, 256], sizes = [8, 128], strides = [1, 1]} : vector<8x384xf32> to vector<8x128xf32>
      %58 = vector.extract_strided_slice %45 {offsets = [0, 256], sizes = [8, 128], strides = [1, 1]} : vector<8x384xf32> to vector<8x128xf32>
      %59 = arith.mulf %55, %58 : vector<8x128xf32>
      %60 = arith.addf %57, %59 : vector<8x128xf32>
      %61 = math.tanh %60 : vector<8x128xf32>
      %cst_46 = arith.constant 1.000000e+00 : f32
      %62 = vector.broadcast %cst_46 : f32 to vector<8x128xf32>
      %63 = arith.subf %62, %56 : vector<8x128xf32>
      %64 = arith.mulf %63, %61 : vector<8x128xf32>
      %65 = arith.mulf %56, %42 : vector<8x128xf32>
      %66 = arith.addf %64, %65 : vector<8x128xf32>
      %67 = vector.broadcast %37 : i32 to vector<8x1xi32>
      %68 = arith.cmpi slt, %67, %20 : vector<8x1xi32>
      %cst_47 = arith.constant 0.000000e+00 : f32
      %69 = vector.shape_cast %68 : vector<8x1xi1> to vector<8x1xi1>
      %70 = vector.broadcast %69 : vector<8x1xi1> to vector<8x128xi1>
      %71 = vector.broadcast %cst_47 : f32 to vector<8x128xf32>
      %72 = arith.select %70, %66, %71 : vector<8x128xi1>, vector<8x128xf32>
      %73 = arith.index_cast %39 : i32 to index
      %c0_48 = arith.constant 0 : index
      %74 = vector.load %arg14[%73, %c0_48] : memref<64x128xf32, #tpu.memory_space<vmem>>, vector<8x128xf32>
      tpu.vector_store %arg14[%73, %c0_48], %72 {strides = array<i32>} : memref<64x128xf32, #tpu.memory_space<vmem>>, vector<8x128xf32>,
      %c0_49 = arith.constant 0 : index
      %c0_50 = arith.constant 0 : index
      %75 = vector.load %arg15[%c0_49, %c0_50] : memref<8x128xf32, #tpu.memory_space<vmem>>, vector<8x128xf32>
      tpu.vector_store %arg15[%c0_49, %c0_50], %66 {strides = array<i32>} : memref<8x128xf32, #tpu.memory_space<vmem>>, vector<8x128xf32>,
    }
    %c0_31 = arith.constant 0 : index
    %c0_32 = arith.constant 0 : index
    %29 = vector.load %arg14[%c0_31, %c0_32] : memref<64x128xf32, #tpu.memory_space<vmem>>, vector<64x128xf32>
    %c0_33 = arith.constant 0 : index
    %c0_34 = arith.constant 0 : index
    %30 = vector.load %arg10[%c0_33, %c0_34] : memref<128x128xf32, #tpu.memory_space<vmem>>, vector<128x128xf32>
    %cst_35 = arith.constant dense<0.000000e+00> : vector<64x128xf32>
    %31 = tpu.matmul %29, %30, %cst_35 {dimension_numbers = #tpu.dot_dimension_numbers<[1], [0], [0], [1], [0, 0, 1, 1], [], []>} : vector<64x128xf32>, vector<128x128xf32>, vector<64x128xf32> -> vector<64x128xf32>
    %c0_36 = arith.constant 0 : index
    %c0_37 = arith.constant 0 : index
    %32 = vector.load %arg11[%c0_36, %c0_37] : memref<1x128xf32, #tpu.memory_space<vmem>>, vector<1x128xf32>
    %33 = vector.broadcast %32 : vector<1x128xf32> to vector<64x128xf32>
    %34 = arith.addf %31, %33 : vector<64x128xf32>
    %c0_38 = arith.constant 0 : index
    %c0_39 = arith.constant 0 : index
    %35 = vector.load %arg12[%c0_38, %c0_39] : memref<64x128xf32, #tpu.memory_space<vmem>>, vector<64x128xf32>
    tpu.vector_store %arg12[%c0_38, %c0_39], %34 {strides = array<i32>} : memref<64x128xf32, #tpu.memory_space<vmem>>, vector<64x128xf32>,
    return
  }
  func.func @transform_0(%arg0: i32, %arg1: memref<1xi32, #tpu.memory_space<smem>>) -> (i32, i32) {
    %c0_i32 = arith.constant 0 : i32
    %c0_i32_0 = arith.constant 0 : i32
    return %arg0, %c0_i32 : i32, i32
  }
  func.func @transform_1(%arg0: i32, %arg1: memref<1xi32, #tpu.memory_space<smem>>) -> (i32, i32) {
    %c0_i32 = arith.constant 0 : i32
    %c0_i32_0 = arith.constant 0 : i32
    return %arg0, %c0_i32 : i32, i32
  }
  func.func @transform_2(%arg0: i32, %arg1: memref<1xi32, #tpu.memory_space<smem>>) -> (i32, i32) {
    %c0_i32 = arith.constant 0 : i32
    %c0_i32_0 = arith.constant 0 : i32
    %c0_i32_1 = arith.constant 0 : i32
    return %c0_i32, %c0_i32_0 : i32, i32
  }
  func.func @transform_3(%arg0: i32, %arg1: memref<1xi32, #tpu.memory_space<smem>>) -> (i32, i32) {
    %c0_i32 = arith.constant 0 : i32
    %c0_i32_0 = arith.constant 0 : i32
    %c0_i32_1 = arith.constant 0 : i32
    return %c0_i32, %c0_i32_0 : i32, i32
  }
  func.func @transform_4(%arg0: i32, %arg1: memref<1xi32, #tpu.memory_space<smem>>) -> (i32, i32) {
    %c0_i32 = arith.constant 0 : i32
    %c0_i32_0 = arith.constant 0 : i32
    %c0_i32_1 = arith.constant 0 : i32
    return %c0_i32, %c0_i32_0 : i32, i32
  }
  func.func @transform_5(%arg0: i32, %arg1: memref<1xi32, #tpu.memory_space<smem>>) -> (i32, i32) {
    %c0_i32 = arith.constant 0 : i32
    %c0_i32_0 = arith.constant 0 : i32
    %c0_i32_1 = arith.constant 0 : i32
    return %c0_i32, %c0_i32_0 : i32, i32
  }
  func.func @transform_6(%arg0: i32, %arg1: memref<1xi32, #tpu.memory_space<smem>>) -> (i32, i32) {
    %c0_i32 = arith.constant 0 : i32
    %c0_i32_0 = arith.constant 0 : i32
    %c0_i32_1 = arith.constant 0 : i32
    return %c0_i32, %c0_i32_0 : i32, i32
  }
  func.func @transform_7(%arg0: i32, %arg1: memref<1xi32, #tpu.memory_space<smem>>) -> (i32, i32) {
    %c0_i32 = arith.constant 0 : i32
    %c0_i32_0 = arith.constant 0 : i32
    %c0_i32_1 = arith.constant 0 : i32
    return %c0_i32, %c0_i32_0 : i32, i32
  }
  func.func @transform_8(%arg0: i32, %arg1: memref<1xi32, #tpu.memory_space<smem>>) -> (i32, i32) {
    %c0_i32 = arith.constant 0 : i32
    %c0_i32_0 = arith.constant 0 : i32
    %c0_i32_1 = arith.constant 0 : i32
    return %c0_i32, %c0_i32_0 : i32, i32
  }
  func.func @transform_9(%arg0: i32, %arg1: memref<1xi32, #tpu.memory_space<smem>>) -> (i32, i32) {
    %c0_i32 = arith.constant 0 : i32
    %c0_i32_0 = arith.constant 0 : i32
    %c0_i32_1 = arith.constant 0 : i32
    return %c0_i32, %c0_i32_0 : i32, i32
  }
  func.func @transform_10(%arg0: i32, %arg1: memref<1xi32, #tpu.memory_space<smem>>) -> (i32, i32) {
    %c0_i32 = arith.constant 0 : i32
    %c0_i32_0 = arith.constant 0 : i32
    return %arg0, %c0_i32 : i32, i32
  }
}

</mosaic_0001>

<llo_original>
// kernel: tpu_custom_call.1
$region0: #{tpu_custom_call.1}
  #allocation0 [shape = 'u32[]', space=smem, size = 0x4, offset = 0x4, fixed_abs, tag = 'smem constant byte address 0x4 - core index']
  #allocation1 [shape = 'u32[72,128]{1,0:T(1,128)}', space=vmem, size = 0x9000, scoped, tag = 'internal scratch']
  #allocation2 [shape = 'f32[64,384]{1,0:T(8,128)}', space=vmem, size = 0x18000, scoped, tag = 'scratch operand']
  #allocation3 [shape = 'f32[64,128]{1,0:T(8,128)}', space=vmem, size = 0x8000, scoped, tag = 'scratch operand']
  #allocation4 [shape = 'f32[8,128]{1,0:T(8,128)}', space=vmem, size = 0x1000, scoped, tag = 'scratch operand']
  #allocation5 [shape = 's32[1]{0}', space=sflag, size = 0x4, scoped, tag = 'scoped memory for tpu_custom_call.1']
  #allocation6 [shape = 's32[1]{0:T(128)S(6)}', space=smem, size = 0x200, scoped, tag = 'prefetched SMEM operand 0']
  %s0 = inlined_call_operand.<no memory space> [shape: s32[1], index: 0, kind: input, shape index: {}]
  %s1 = inlined_call_operand.vmem [shape: f32[64,32], index: 1, kind: input, shape index: {}]
  %s2 = inlined_call_operand.vmem [shape: s32[8,1], index: 2, kind: input, shape index: {}]
  %s3 = inlined_call_operand.vmem [shape: f32[32,128], index: 3, kind: input, shape index: {}]
  %s4 = inlined_call_operand.vmem [shape: f32[1,128], index: 4, kind: input, shape index: {}]
  %s5 = inlined_call_operand.hbm [shape: f32[128,384], index: 5, kind: input, shape index: {}]
  %s6 = inlined_call_operand.vmem [shape: f32[1,384], index: 6, kind: input, shape index: {}]
  %s7 = inlined_call_operand.hbm [shape: f32[128,384], index: 7, kind: input, shape index: {}]
  %s8 = inlined_call_operand.vmem [shape: f32[1,384], index: 8, kind: input, shape index: {}]
  %s9 = inlined_call_operand.hbm [shape: f32[128,128], index: 9, kind: input, shape index: {}]
  %s10 = inlined_call_operand.vmem [shape: f32[1,128], index: 10, kind: input, shape index: {}]
  %s11 = inlined_call_operand.hbm [shape: f32[64,128], index: 11, kind: output, shape index: {}]
  %s12 = sld [smem:[#allocation0]]
  $region69: #{tpu_custom_call.1} parent=0
    _
  %s14 = ssub.s32 1, %s12
  %s15 = scalar_select 0, %s14, %s12
  %16 = sst [smem:[#allocation6]] %s0
  $region1: #{tpu_custom_call.1} parent=0
    #allocation7 [shape = 'u8[196608]{0}', space=vmem, size = 0x30000, scoped, tag = 'input window, operand 5, single buffered']
    #allocation8 [shape = 's32[1]{0}', space=sflag, size = 0x4, scoped, tag = 'scoped memory for tpu_custom_call.1']
    #allocation9 [shape = 's32[1]{0}', space=sflag, size = 0x4, scoped, tag = 'scoped memory for tpu_custom_call.1']
    #allocation10 [shape = 'u8[196608]{0}', space=vmem, size = 0x30000, scoped, tag = 'input window, operand 7, single buffered']
    #allocation11 [shape = 's32[1]{0}', space=sflag, size = 0x4, scoped, tag = 'scoped memory for tpu_custom_call.1']
    #allocation12 [shape = 'u8[65536]{0}', space=vmem, size = 0x10000, scoped, tag = 'input window, operand 9, single buffered']
    #allocation13 [shape = 'u8[32768]{0}', space=vmem, size = 0x8000, scoped, tag = 'output window, operand 0, single buffered']
    %17 = vsyncpa [#allocation8], 0
    %18 = vsyncpa [#allocation11], 0
    %19 = vsyncpa [#allocation9], 0
    // Predicated region
    $region2: #{tpu_custom_call.1} parent=1 // pred_check
      _
    $region3: #{tpu_custom_call.1} parent=1 // pred_check_branch
      %21 = sbr.rel (0) target = $region5
    $region4: #{tpu_custom_call.1} parent=1 // pred_region
      _
    $region5: #{tpu_custom_call.1} parent=1 // pred_fallthru
      _
    // Predicated region
    $region6: #{tpu_custom_call.1} parent=1 // pred_check
      _
    $region7: #{tpu_custom_call.1} parent=1 // pred_check_branch
      %23 = sbr.rel (0) target = $region9
    $region8: #{tpu_custom_call.1} parent=1 // pred_region
      _
    $region9: #{tpu_custom_call.1} parent=1 // pred_fallthru
      _
    // Predicated region
    $region10: #{tpu_custom_call.1} parent=1 // pred_check
      _
    $region11: #{tpu_custom_call.1} parent=1 // pred_check_branch
      %25 = sbr.rel (0) target = $region13
    $region12: #{tpu_custom_call.1} parent=1 // pred_region
      _
    $region13: #{tpu_custom_call.1} parent=1 // pred_fallthru
      _
    // Predicated region
    $region14: #{tpu_custom_call.1} parent=1 // pred_check
      _
    $region15: #{tpu_custom_call.1} parent=1 // pred_check_branch
      %27 = sbr.rel (0) target = $region17
    $region16: #{tpu_custom_call.1} parent=1 // pred_region
      _
    $region17: #{tpu_custom_call.1} parent=1 // pred_fallthru
      _
    // Predicated region
    $region18: #{tpu_custom_call.1} parent=1 // pred_check
      _
    $region19: #{tpu_custom_call.1} parent=1 // pred_check_branch
      %29 = sbr.rel (0) target = $region21
    $region20: #{tpu_custom_call.1} parent=1 // pred_region
      %31 = vsyncadd [#allocation8], 0
      %s32 = sshll.u32 %s5, 4
      %s33 = int_to_ptr.hbm [resolvable:$true] %s32
      %s34 = sshll.u32 [#allocation7], 4
      %s35 = int_to_ptr.vmem [resolvable:$true] %s34
      %40 = dma.hbm_to_vmem [thread:$0]  %s33, 6144, %s35, [#allocation8], 384, 384, 24
    $region21: #{tpu_custom_call.1} parent=1 // pred_fallthru
      _
    // Predicated region
    $region22: #{tpu_custom_call.1} parent=1 // pred_check
      _
    $region23: #{tpu_custom_call.1} parent=1 // pred_check_branch
      %42 = sbr.rel (0) target = $region25
    $region24: #{tpu_custom_call.1} parent=1 // pred_region
      _
    $region25: #{tpu_custom_call.1} parent=1 // pred_fallthru
      _
    // Predicated region
    $region26: #{tpu_custom_call.1} parent=1 // pred_check
      _
    $region27: #{tpu_custom_call.1} parent=1 // pred_check_branch
      %44 = sbr.rel (0) target = $region29
    $region28: #{tpu_custom_call.1} parent=1 // pred_region
      %46 = vsyncadd [#allocation11], 0
      %s47 = sshll.u32 %s7, 4
      %s48 = int_to_ptr.hbm [resolvable:$true] %s47
      %s49 = sshll.u32 [#allocation10], 4
      %s50 = int_to_ptr.vmem [resolvable:$true] %s49
      %55 = dma.hbm_to_vmem [thread:$0]  %s48, 6144, %s50, [#allocation11], 384, 384, 24
    $region29: #{tpu_custom_call.1} parent=1 // pred_fallthru
      _
    // Predicated region
    $region30: #{tpu_custom_call.1} parent=1 // pred_check
      _
    $region31: #{tpu_custom_call.1} parent=1 // pred_check_branch
      %57 = sbr.rel (0) target = $region33
    $region32: #{tpu_custom_call.1} parent=1 // pred_region
      _
    $region33: #{tpu_custom_call.1} parent=1 // pred_fallthru
      _
    // Predicated region
    $region34: #{tpu_custom_call.1} parent=1 // pred_check
      _
    $region35: #{tpu_custom_call.1} parent=1 // pred_check_branch
      %59 = sbr.rel (0) target = $region37
    $region36: #{tpu_custom_call.1} parent=1 // pred_region
      %61 = vsyncadd [#allocation11], 0
      %s62 = sshll.u32 %s9, 4
      %s63 = int_to_ptr.hbm [resolvable:$true] %s62
      %s64 = sshll.u32 [#allocation12], 4
      %s65 = int_to_ptr.vmem [resolvable:$true] %s64
      %70 = dma.hbm_to_vmem [thread:$0]  %s63, 2048, %s65, [#allocation11], 128, 128, 8
    $region37: #{tpu_custom_call.1} parent=1 // pred_fallthru
      _
    // Predicated region
    $region38: #{tpu_custom_call.1} parent=1 // pred_check
      _
    $region39: #{tpu_custom_call.1} parent=1 // pred_check_branch
      %72 = sbr.rel (0) target = $region41
    $region40: #{tpu_custom_call.1} parent=1 // pred_region
      _
    $region41: #{tpu_custom_call.1} parent=1 // pred_fallthru
      _
    // Predicated region
    $region42: #{tpu_custom_call.1} parent=1 // pred_check
      _
    $region43: #{tpu_custom_call.1} parent=1 // pred_check_branch
      %74 = sbr.rel (0) target = $region45
    $region44: #{tpu_custom_call.1} parent=1 // pred_region
      %76 = dma.done [#allocation8], 6144
    $region45: #{tpu_custom_call.1} parent=1 // pred_fallthru
      _
    // Predicated region
    $region46: #{tpu_custom_call.1} parent=1 // pred_check
      _
    $region47: #{tpu_custom_call.1} parent=1 // pred_check_branch
      %78 = sbr.rel (0) target = $region49
    $region48: #{tpu_custom_call.1} parent=1 // pred_region
      %80 = dma.done [#allocation11], 6144
    $region49: #{tpu_custom_call.1} parent=1 // pred_fallthru
      _
    // Predicated region
    $region50: #{tpu_custom_call.1} parent=1 // pred_check
      _
    $region51: #{tpu_custom_call.1} parent=1 // pred_check_branch
      %82 = sbr.rel (0) target = $region53
    $region52: #{tpu_custom_call.1} parent=1 // pred_region
      %84 = dma.done [#allocation11], 2048
    $region53: #{tpu_custom_call.1} parent=1 // pred_fallthru
      _
    %s85 = sld [smem:[#allocation6]]
    %v86 = vld [vmem:[%s1] sm:$0xff]
    %v87 = vld [vmem:[%s1 + $0x8] sm:$0xff]
    %v88 = vld [vmem:[%s1 + $0x10] sm:$0xff]
    %v89 = vld [vmem:[%s1 + $0x18] sm:$0xff]
    %v90 = vld [vmem:[%s1 + $0x20] sm:$0xff]
    %v91 = vld [vmem:[%s1 + $0x28] sm:$0xff]
    %v92 = vld [vmem:[%s1 + $0x30] sm:$0xff]
    %v93 = vld [vmem:[%s1 + $0x38] sm:$0xff]
    %v94 = vld [vmem:[%s3] sm:$0xff]
    %v95 = vld [vmem:[%s3 + $0x8] sm:$0xff]
    %v96 = vld [vmem:[%s3 + $0x10] sm:$0xff]
    %v97 = vld [vmem:[%s3 + $0x18] sm:$0xff]
    %v98 = vld [vmem:[%s4] sm:$0x1]
    %v100 = vperm.slane %v98, 0
    %vm102 = vcmask 261120
    %v104 = vsel %vm102, %v86, 0
    %v107 = vsel %vm102, %v87, 0
    %v110 = vsel %vm102, %v88, 0
    %v113 = vsel %vm102, %v89, 0
    %v116 = vsel %vm102, %v90, 0
    %v119 = vsel %vm102, %v91, 0
    %v122 = vsel %vm102, %v92, 0
    %v125 = vsel %vm102, %v93, 0
    %127 = vmatpush.msra.mxu0 0.0
    %128 = vmatpush.msra.mxu0 0.0
    %129 = vmatpush.msra.mxu0 0.0
    %130 = vmatpush.msra.mxu0 0.0
    %131 = vmatpush.msra.mxu0 0.0
    %132 = vmatpush.msra.mxu0 0.0
    %133 = vmatpush.msra.mxu0 0.0
    %134 = vmatpush.msra.mxu0 0.0
    %135 = vmatpush.msra.mxu0 0.0
    %136 = vmatpush.msra.mxu0 0.0
    %137 = vmatpush.msra.mxu0 0.0
    %138 = vmatpush.msra.mxu0 0.0
    %139 = vmatpush.msra.mxu0 %v97
    %140 = vmatpush.msra.mxu0 %v96
    %141 = vmatpush.msra.mxu0 %v95
    %142 = vmatpush.msra.mxu0 %v94
    %143 = vmatmul.f32.gmra.mxu0 %v104
    %v144 = vpop.f32.mrf.mxu0
    %v145 = vadd.f32 %v100, %v144
    %146 = vmatmul.f32.gmra.mxu0 %v107
    %v147 = vpop.f32.mrf.mxu0
    %v148 = vadd.f32 %v100, %v147
    %149 = vmatmul.f32.gmra.mxu0 %v110
    %v150 = vpop.f32.mrf.mxu0
    %v151 = vadd.f32 %v100, %v150
    %152 = vmatmul.f32.gmra.mxu0 %v113
    %v153 = vpop.f32.mrf.mxu0
    %v154 = vadd.f32 %v100, %v153
    %155 = vmatmul.f32.gmra.mxu0 %v116
    %v156 = vpop.f32.mrf.mxu0
    %v157 = vadd.f32 %v100, %v156
    %158 = vmatmul.f32.gmra.mxu0 %v119
    %v159 = vpop.f32.mrf.mxu0
    %v160 = vadd.f32 %v100, %v159
    %161 = vmatmul.f32.gmra.mxu0 %v122
    %v162 = vpop.f32.mrf.mxu0
    %v163 = vadd.f32 %v100, %v162
    %164 = vmatmul.f32.gmra.mxu0 %v125
    %v165 = vpop.f32.mrf.mxu0
    %v166 = vadd.f32 %v100, %v165
    %167 = vdwg.mxu0
    %v168 = vmax.f32 %v145, 0.0
    %v169 = vmax.f32 %v148, 0.0
    %v170 = vmax.f32 %v151, 0.0
    %v171 = vmax.f32 %v154, 0.0
    %v172 = vmax.f32 %v157, 0.0
    %v173 = vmax.f32 %v160, 0.0
    %v174 = vmax.f32 %v163, 0.0
    %v175 = vmax.f32 %v166, 0.0
    %v176 = vld [vmem:[#allocation7] sm:$0xff]
    %v177 = vld [vmem:[#allocation7 + $0x8] sm:$0xff]
    %v178 = vld [vmem:[#allocation7 + $0x10] sm:$0xff]
    %v179 = vld [vmem:[#allocation7 + $0x18] sm:$0xff]
    %v180 = vld [vmem:[#allocation7 + $0x20] sm:$0xff]
    %v181 = vld [vmem:[#allocation7 + $0x28] sm:$0xff]
    %v182 = vld [vmem:[#allocation7 + $0x30] sm:$0xff]
    %v183 = vld [vmem:[#allocation7 + $0x38] sm:$0xff]
    %v184 = vld [vmem:[#allocation7 + $0x40] sm:$0xff]
    %v185 = vld [vmem:[#allocation7 + $0x48] sm:$0xff]
    %v186 = vld [vmem:[#allocation7 + $0x50] sm:$0xff]
    %v187 = vld [vmem:[#allocation7 + $0x58] sm:$0xff]
    %v188 = vld [vmem:[#allocation7 + $0x60] sm:$0xff]
    %v189 = vld [vmem:[#allocation7 + $0x68] sm:$0xff]
    %v190 = vld [vmem:[#allocation7 + $0x70] sm:$0xff]
    %v191 = vld [vmem:[#allocation7 + $0x78] sm:$0xff]
    %v192 = vld [vmem:[#allocation7 + $0x80] sm:$0xff]
    %v193 = vld [vmem:[#allocation7 + $0x88] sm:$0xff]
    %v194 = vld [vmem:[#allocation7 + $0x90] sm:$0xff]
    %v195 = vld [vmem:[#allocation7 + $0x98] sm:$0xff]
    %v196 = vld [vmem:[#allocation7 + $0xa0] sm:$0xff]
    %v197 = vld [vmem:[#allocation7 + $0xa8] sm:$0xff]
    %v198 = vld [vmem:[#allocation7 + $0xb0] sm:$0xff]
    %v199 = vld [vmem:[#allocation7 + $0xb8] sm:$0xff]
    %v200 = vld [vmem:[#allocation7 + $0xc0] sm:$0xff]
    %v201 = vld [vmem:[#allocation7 + $0xc8] sm:$0xff]
    %v202 = vld [vmem:[#allocation7 + $0xd0] sm:$0xff]
    %v203 = vld [vmem:[#allocation7 + $0xd8] sm:$0xff]
    %v204 = vld [vmem:[#allocation7 + $0xe0] sm:$0xff]
    %v205 = vld [vmem:[#allocation7 + $0xe8] sm:$0xff]
    %v206 = vld [vmem:[#allocation7 + $0xf0] sm:$0xff]
    %v207 = vld [vmem:[#allocation7 + $0xf8] sm:$0xff]
    %v208 = vld [vmem:[#allocation7 + $0x100] sm:$0xff]
    %v209 = vld [vmem:[#allocation7 + $0x108] sm:$0xff]
    %v210 = vld [vmem:[#allocation7 + $0x110] sm:$0xff]
    %v211 = vld [vmem:[#allocation7 + $0x118] sm:$0xff]
    %v212 = vld [vmem:[#allocation7 + $0x120] sm:$0xff]
    %v213 = vld [vmem:[#allocation7 + $0x128] sm:$0xff]
    %v214 = vld [vmem:[#allocation7 + $0x130] sm:$0xff]
    %v215 = vld [vmem:[#allocation7 + $0x138] sm:$0xff]
    %v216 = vld [vmem:[#allocation7 + $0x140] sm:$0xff]
    %v217 = vld [vmem:[#allocation7 + $0x148] sm:$0xff]
    %v218 = vld [vmem:[#allocation7 + $0x150] sm:$0xff]
    %v219 = vld [vmem:[#allocation7 + $0x158] sm:$0xff]
    %v220 = vld [vmem:[#allocation7 + $0x160] sm:$0xff]
    %v221 = vld [vmem:[#allocation7 + $0x168] sm:$0xff]
    %v222 = vld [vmem:[#allocation7 + $0x170] sm:$0xff]
    %v223 = vld [vmem:[#allocation7 + $0x178] sm:$0xff]
    %v224 = vld [vmem:[%s6] sm:$0x7]
    %v226 = vperm.slane %v224, 0
    %v227 = vperm.slane %v224, 1
    %v228 = vperm.slane %v224, 2
    %232 = vmatpush.msra.mxu0 %v221
    %233 = vmatpush.msra.mxu0 %v218
    %234 = vmatpush.msra.mxu0 %v215
    %235 = vmatpush.msra.mxu0 %v212
    %236 = vmatpush.msra.mxu0 %v209
    %237 = vmatpush.msra.mxu0 %v206
    %238 = vmatpush.msra.mxu0 %v203
    %239 = vmatpush.msra.mxu0 %v200
    %240 = vmatpush.msra.mxu0 %v197
    %241 = vmatpush.msra.mxu0 %v194
    %242 = vmatpush.msra.mxu0 %v191
    %243 = vmatpush.msra.mxu0 %v188
    %244 = vmatpush.msra.mxu0 %v185
    %245 = vmatpush.msra.mxu0 %v182
    %246 = vmatpush.msra.mxu0 %v179
    %247 = vmatpush.msra.mxu0 %v176
    %248 = vmatmul.f32.gmra.mxu0 %v168
    %v249 = vpop.f32.mrf.mxu0
    %v250 = vadd.f32 %v226, %v249
    %251 = vmatmul.f32.gmra.mxu0 %v169
    %v252 = vpop.f32.mrf.mxu0
    %v253 = vadd.f32 %v226, %v252
    %254 = vmatmul.f32.gmra.mxu0 %v170
    %v255 = vpop.f32.mrf.mxu0
    %v256 = vadd.f32 %v226, %v255
    %257 = vmatmul.f32.gmra.mxu0 %v171
    %v258 = vpop.f32.mrf.mxu0
    %v259 = vadd.f32 %v226, %v258
    %260 = vmatmul.f32.gmra.mxu0 %v172
    %v261 = vpop.f32.mrf.mxu0
    %v262 = vadd.f32 %v226, %v261
    %263 = vmatmul.f32.gmra.mxu0 %v173
    %v264 = vpop.f32.mrf.mxu0
    %v265 = vadd.f32 %v226, %v264
    %266 = vmatmul.f32.gmra.mxu0 %v174
    %v267 = vpop.f32.mrf.mxu0
    %v268 = vadd.f32 %v226, %v267
    %269 = vmatmul.f32.gmra.mxu0 %v175
    %v270 = vpop.f32.mrf.mxu0
    %v271 = vadd.f32 %v226, %v270
    %272 = vdwg.mxu0
    %273 = vmatpush.msra.mxu0 %v222
    %274 = vmatpush.msra.mxu0 %v219
    %275 = vmatpush.msra.mxu0 %v216
    %276 = vmatpush.msra.mxu0 %v213
    %277 = vmatpush.msra.mxu0 %v210
    %278 = vmatpush.msra.mxu0 %v207
    %279 = vmatpush.msra.mxu0 %v204
    %280 = vmatpush.msra.mxu0 %v201
    %281 = vmatpush.msra.mxu0 %v198
    %282 = vmatpush.msra.mxu0 %v195
    %283 = vmatpush.msra.mxu0 %v192
    %284 = vmatpush.msra.mxu0 %v189
    %285 = vmatpush.msra.mxu0 %v186
    %286 = vmatpush.msra.mxu0 %v183
    %287 = vmatpush.msra.mxu0 %v180
    %288 = vmatpush.msra.mxu0 %v177
    %289 = vmatmul.f32.gmra.mxu0 %v168
    %v290 = vpop.f32.mrf.mxu0
    %v291 = vadd.f32 %v227, %v290
    %292 = vmatmul.f32.gmra.mxu0 %v169
    %v293 = vpop.f32.mrf.mxu0
    %v294 = vadd.f32 %v227, %v293
    %295 = vmatmul.f32.gmra.mxu0 %v170
    %v296 = vpop.f32.mrf.mxu0
    %v297 = vadd.f32 %v227, %v296
    %298 = vmatmul.f32.gmra.mxu0 %v171
    %v299 = vpop.f32.mrf.mxu0
    %v300 = vadd.f32 %v227, %v299
    %301 = vmatmul.f32.gmra.mxu0 %v172
    %v302 = vpop.f32.mrf.mxu0
    %v303 = vadd.f32 %v227, %v302
    %304 = vmatmul.f32.gmra.mxu0 %v173
    %v305 = vpop.f32.mrf.mxu0
    %v306 = vadd.f32 %v227, %v305
    %307 = vmatmul.f32.gmra.mxu0 %v174
    %v308 = vpop.f32.mrf.mxu0
    %v309 = vadd.f32 %v227, %v308
    %310 = vmatmul.f32.gmra.mxu0 %v175
    %v311 = vpop.f32.mrf.mxu0
    %v312 = vadd.f32 %v227, %v311
    %313 = vdwg.mxu0
    %314 = vmatpush.msra.mxu0 %v223
    %315 = vmatpush.msra.mxu0 %v220
    %316 = vmatpush.msra.mxu0 %v217
    %317 = vmatpush.msra.mxu0 %v214
    %318 = vmatpush.msra.mxu0 %v211
    %319 = vmatpush.msra.mxu0 %v208
    %320 = vmatpush.msra.mxu0 %v205
    %321 = vmatpush.msra.mxu0 %v202
    %322 = vmatpush.msra.mxu0 %v199
    %323 = vmatpush.msra.mxu0 %v196
    %324 = vmatpush.msra.mxu0 %v193
    %325 = vmatpush.msra.mxu0 %v190
    %326 = vmatpush.msra.mxu0 %v187
    %327 = vmatpush.msra.mxu0 %v184
    %328 = vmatpush.msra.mxu0 %v181
    %329 = vmatpush.msra.mxu0 %v178
    %330 = vmatmul.f32.gmra.mxu0 %v168
    %v331 = vpop.f32.mrf.mxu0
    %v332 = vadd.f32 %v228, %v331
    %333 = vmatmul.f32.gmra.mxu0 %v169
    %v334 = vpop.f32.mrf.mxu0
    %v335 = vadd.f32 %v228, %v334
    %336 = vmatmul.f32.gmra.mxu0 %v170
    %v337 = vpop.f32.mrf.mxu0
    %v338 = vadd.f32 %v228, %v337
    %339 = vmatmul.f32.gmra.mxu0 %v171
    %v340 = vpop.f32.mrf.mxu0
    %v341 = vadd.f32 %v228, %v340
    %342 = vmatmul.f32.gmra.mxu0 %v172
    %v343 = vpop.f32.mrf.mxu0
    %v344 = vadd.f32 %v228, %v343
    %345 = vmatmul.f32.gmra.mxu0 %v173
    %v346 = vpop.f32.mrf.mxu0
    %v347 = vadd.f32 %v228, %v346
    %348 = vmatmul.f32.gmra.mxu0 %v174
    %v349 = vpop.f32.mrf.mxu0
    %v350 = vadd.f32 %v228, %v349
    %351 = vmatmul.f32.gmra.mxu0 %v175
    %v352 = vpop.f32.mrf.mxu0
    %v353 = vadd.f32 %v228, %v352
    %354 = vdwg.mxu0
    %355 = vst [vmem:[#allocation2] sm:$0xff] %v250
    %356 = vst [vmem:[#allocation2 + $0x8] sm:$0xff] %v291
    %357 = vst [vmem:[#allocation2 + $0x10] sm:$0xff] %v332
    %358 = vst [vmem:[#allocation2 + $0x18] sm:$0xff] %v253
    %359 = vst [vmem:[#allocation2 + $0x20] sm:$0xff] %v294
    %360 = vst [vmem:[#allocation2 + $0x28] sm:$0xff] %v335
    %361 = vst [vmem:[#allocation2 + $0x30] sm:$0xff] %v256
    %362 = vst [vmem:[#allocation2 + $0x38] sm:$0xff] %v297
    %363 = vst [vmem:[#allocation2 + $0x40] sm:$0xff] %v338
    %364 = vst [vmem:[#allocation2 + $0x48] sm:$0xff] %v259
    %365 = vst [vmem:[#allocation2 + $0x50] sm:$0xff] %v300
    %366 = vst [vmem:[#allocation2 + $0x58] sm:$0xff] %v341
    %367 = vst [vmem:[#allocation2 + $0x60] sm:$0xff] %v262
    %368 = vst [vmem:[#allocation2 + $0x68] sm:$0xff] %v303
    %369 = vst [vmem:[#allocation2 + $0x70] sm:$0xff] %v344
    %370 = vst [vmem:[#allocation2 + $0x78] sm:$0xff] %v265
    %371 = vst [vmem:[#allocation2 + $0x80] sm:$0xff] %v306
    %372 = vst [vmem:[#allocation2 + $0x88] sm:$0xff] %v347
    %373 = vst [vmem:[#allocation2 + $0x90] sm:$0xff] %v268
    %374 = vst [vmem:[#allocation2 + $0x98] sm:$0xff] %v309
    %375 = vst [vmem:[#allocation2 + $0xa0] sm:$0xff] %v350
    %376 = vst [vmem:[#allocation2 + $0xa8] sm:$0xff] %v271
    %377 = vst [vmem:[#allocation2 + $0xb0] sm:$0xff] %v312
    %378 = vst [vmem:[#allocation2 + $0xb8] sm:$0xff] %v353
    %379 = vst [vmem:[#allocation3] sm:$0xff] 0.0
    %380 = vst [vmem:[#allocation3 + $0x8] sm:$0xff] 0.0
    %381 = vst [vmem:[#allocation3 + $0x10] sm:$0xff] 0.0
    %382 = vst [vmem:[#allocation3 + $0x18] sm:$0xff] 0.0
    %383 = vst [vmem:[#allocation3 + $0x20] sm:$0xff] 0.0
    %384 = vst [vmem:[#allocation3 + $0x28] sm:$0xff] 0.0
    %385 = vst [vmem:[#allocation3 + $0x30] sm:$0xff] 0.0
    %386 = vst [vmem:[#allocation3 + $0x38] sm:$0xff] 0.0
    %387 = vst [vmem:[#allocation4] sm:$0xff] 0.0
    %v388 = vld [vmem:[%s2] sm:$0xff]
    %v389 = vld [vmem:[#allocation10] sm:$0xff]
    %v390 = vld [vmem:[#allocation10 + $0x8] sm:$0xff]
    %v391 = vld [vmem:[#allocation10 + $0x10] sm:$0xff]
    %v392 = vld [vmem:[#allocation10 + $0x18] sm:$0xff]
    %v393 = vld [vmem:[#allocation10 + $0x20] sm:$0xff]
    %v394 = vld [vmem:[#allocation10 + $0x28] sm:$0xff]
    %v395 = vld [vmem:[#allocation10 + $0x30] sm:$0xff]
    %v396 = vld [vmem:[#allocation10 + $0x38] sm:$0xff]
    %v397 = vld [vmem:[#allocation10 + $0x40] sm:$0xff]
    %v398 = vld [vmem:[#allocation10 + $0x48] sm:$0xff]
    %v399 = vld [vmem:[#allocation10 + $0x50] sm:$0xff]
    %v400 = vld [vmem:[#allocation10 + $0x58] sm:$0xff]
    %v401 = vld [vmem:[#allocation10 + $0x60] sm:$0xff]
    %v402 = vld [vmem:[#allocation10 + $0x68] sm:$0xff]
    %v403 = vld [vmem:[#allocation10 + $0x70] sm:$0xff]
    %v404 = vld [vmem:[#allocation10 + $0x78] sm:$0xff]
    %v405 = vld [vmem:[#allocation10 + $0x80] sm:$0xff]
    %v406 = vld [vmem:[#allocation10 + $0x88] sm:$0xff]
    %v407 = vld [vmem:[#allocation10 + $0x90] sm:$0xff]
    %v408 = vld [vmem:[#allocation10 + $0x98] sm:$0xff]
    %v409 = vld [vmem:[#allocation10 + $0xa0] sm:$0xff]
    %v410 = vld [vmem:[#allocation10 + $0xa8] sm:$0xff]
    %v411 = vld [vmem:[#allocation10 + $0xb0] sm:$0xff]
    %v412 = vld [vmem:[#allocation10 + $0xb8] sm:$0xff]
    %v413 = vld [vmem:[#allocation10 + $0xc0] sm:$0xff]
    %v414 = vld [vmem:[#allocation10 + $0xc8] sm:$0xff]
    %v415 = vld [vmem:[#allocation10 + $0xd0] sm:$0xff]
    %v416 = vld [vmem:[#allocation10 + $0xd8] sm:$0xff]
    %v417 = vld [vmem:[#allocation10 + $0xe0] sm:$0xff]
    %v418 = vld [vmem:[#allocation10 + $0xe8] sm:$0xff]
    %v419 = vld [vmem:[#allocation10 + $0xf0] sm:$0xff]
    %v420 = vld [vmem:[#allocation10 + $0xf8] sm:$0xff]
    %v421 = vld [vmem:[#allocation10 + $0x100] sm:$0xff]
    %v422 = vld [vmem:[#allocation10 + $0x108] sm:$0xff]
    %v423 = vld [vmem:[#allocation10 + $0x110] sm:$0xff]
    %v424 = vld [vmem:[#allocation10 + $0x118] sm:$0xff]
    %v425 = vld [vmem:[#allocation10 + $0x120] sm:$0xff]
    %v426 = vld [vmem:[#allocation10 + $0x128] sm:$0xff]
    %v427 = vld [vmem:[#allocation10 + $0x130] sm:$0xff]
    %v428 = vld [vmem:[#allocation10 + $0x138] sm:$0xff]
    %v429 = vld [vmem:[#allocation10 + $0x140] sm:$0xff]
    %v430 = vld [vmem:[#allocation10 + $0x148] sm:$0xff]
    %v431 = vld [vmem:[#allocation10 + $0x150] sm:$0xff]
    %v432 = vld [vmem:[#allocation10 + $0x158] sm:$0xff]
    %v433 = vld [vmem:[#allocation10 + $0x160] sm:$0xff]
    %v434 = vld [vmem:[#allocation10 + $0x168] sm:$0xff]
    %v435 = vld [vmem:[#allocation10 + $0x170] sm:$0xff]
    %v436 = vld [vmem:[#allocation10 + $0x178] sm:$0xff]
    %v437 = vld [vmem:[%s8] sm:$0x7]
    // While loop
    $region54: #{tpu_custom_call.1} parent=1 // loop_pre_header
      _
    $region55: #{tpu_custom_call.1} parent=1 // loop_header
      %s439 = sphi 0, %s441
      %p440 = scmp.ge.s32.totalorder %s439, %s85
    $region56: #{tpu_custom_call.1} parent=1 // loop_header_branch
      %443 = sbr.rel (%p440) target = $region60
    $region57: #{tpu_custom_call.1} parent=1 // loop_body
      %s444 = smul.u32 %s439, 8
      %s445 = sshra.s32 %s444, 3
      %s446 = sand.u32 %s444, 7
      %s447 = smul.u32 %s445, 3
      %s448 = smul.addr %s447, 8
      %s449 = scalar_lea.vmem [#allocation2], %s448
      %v450 = vld [vmem:[%s449] sm:$0xff]
      %v451 = vld [vmem:[%s449 + $0x8] sm:$0xff]
      %v452 = vld [vmem:[%s449 + $0x10] sm:$0xff]
      %v453 = vld [vmem:[#allocation4] sm:$0xff]
      %v455 = vperm.slane %v437, 0
      %v456 = vperm.slane %v437, 1
      %v457 = vperm.slane %v437, 2
      %461 = vmatpush.msra.mxu0 %v434
      %462 = vmatpush.msra.mxu0 %v431
      %463 = vmatpush.msra.mxu0 %v428
      %464 = vmatpush.msra.mxu0 %v425
      %465 = vmatpush.msra.mxu0 %v422
      %466 = vmatpush.msra.mxu0 %v419
      %467 = vmatpush.msra.mxu0 %v416
      %468 = vmatpush.msra.mxu0 %v413
      %469 = vmatpush.msra.mxu0 %v410
      %470 = vmatpush.msra.mxu0 %v407
      %471 = vmatpush.msra.mxu0 %v404
      %472 = vmatpush.msra.mxu0 %v401
      %473 = vmatpush.msra.mxu0 %v398
      %474 = vmatpush.msra.mxu0 %v395
      %475 = vmatpush.msra.mxu0 %v392
      %476 = vmatpush.msra.mxu0 %v389
      %477 = vmatmul.f32.gmra.mxu0 %v453
      %v478 = vpop.f32.mrf.mxu0
      %v479 = vadd.f32 %v455, %v478
      %480 = vdwg.mxu0
      %481 = vmatpush.msra.mxu0 %v435
      %482 = vmatpush.msra.mxu0 %v432
      %483 = vmatpush.msra.mxu0 %v429
      %484 = vmatpush.msra.mxu0 %v426
      %485 = vmatpush.msra.mxu0 %v423
      %486 = vmatpush.msra.mxu0 %v420
      %487 = vmatpush.msra.mxu0 %v417
      %488 = vmatpush.msra.mxu0 %v414
      %489 = vmatpush.msra.mxu0 %v411
      %490 = vmatpush.msra.mxu0 %v408
      %491 = vmatpush.msra.mxu0 %v405
      %492 = vmatpush.msra.mxu0 %v402
      %493 = vmatpush.msra.mxu0 %v399
      %494 = vmatpush.msra.mxu0 %v396
      %495 = vmatpush.msra.mxu0 %v393
      %496 = vmatpush.msra.mxu0 %v390
      %497 = vmatmul.f32.gmra.mxu0 %v453
      %v498 = vpop.f32.mrf.mxu0
      %v499 = vadd.f32 %v456, %v498
      %500 = vdwg.mxu0
      %501 = vmatpush.msra.mxu0 %v436
      %502 = vmatpush.msra.mxu0 %v433
      %503 = vmatpush.msra.mxu0 %v430
      %504 = vmatpush.msra.mxu0 %v427
      %505 = vmatpush.msra.mxu0 %v424
      %506 = vmatpush.msra.mxu0 %v421
      %507 = vmatpush.msra.mxu0 %v418
      %508 = vmatpush.msra.mxu0 %v415
      %509 = vmatpush.msra.mxu0 %v412
      %510 = vmatpush.msra.mxu0 %v409
      %511 = vmatpush.msra.mxu0 %v406
      %512 = vmatpush.msra.mxu0 %v403
      %513 = vmatpush.msra.mxu0 %v400
      %514 = vmatpush.msra.mxu0 %v397
      %515 = vmatpush.msra.mxu0 %v394
      %516 = vmatpush.msra.mxu0 %v391
      %517 = vmatmul.f32.gmra.mxu0 %v453
      %v518 = vpop.f32.mrf.mxu0
      %v519 = vadd.f32 %v457, %v518
      %520 = vdwg.mxu0
      %v521 = vadd.f32 %v450, %v479
      %v522 = vadd.f32 %v451, %v499
      %v523 = vsub.f32 0.0, %v521
      %v524 = vsub.f32 0.0, %v522
      %v525 = vmul.f32 %v523, 1.442695
      %v526 = vpow.pop %v525
      %v527 = vmul.f32 %v524, 1.442695
      %v528 = vpow.pop %v527
      %v529 = vadd.f32 %v526, 1.0
      %v530 = vadd.f32 %v528, 1.0
      %v531 = vrcp.pop %v529
      %v532 = vmul.f32 %v529, %v531
      %v533 = vsub.f32 1.0, %v532
      %v534 = vmul.f32 %v531, %v533
      %v535 = vadd.f32 %v531, %v534
      %vm536 = vweird.f32 %v529
      %vm537 = vweird.f32 %v531
      %vm538 = vmor %vm536, %vm537
      %v539 = vsel %vm538, %v531, %v535
      %v540 = vand.u32 2147483647, %v529
      %vm541 = vcmp.eq.f32.partialorder %v540, 8.507059e+37
      %v542 = vand.u32 %v529, 2147483648
      %v543 = vor.u32 1.1754944e-38, %v542
      %v544 = vsel %vm541, %v543, %v539
      %v545 = vrcp.pop %v530
      %v546 = vmul.f32 %v530, %v545
      %v547 = vsub.f32 1.0, %v546
      %v548 = vmul.f32 %v545, %v547
      %v549 = vadd.f32 %v545, %v548
      %vm550 = vweird.f32 %v530
      %vm551 = vweird.f32 %v545
      %vm552 = vmor %vm550, %vm551
      %v553 = vsel %vm552, %v545, %v549
      %v554 = vand.u32 2147483647, %v530
      %vm555 = vcmp.eq.f32.partialorder %v554, 8.507059e+37
      %v556 = vand.u32 %v530, 2147483648
      %v557 = vor.u32 1.1754944e-38, %v556
      %v558 = vsel %vm555, %v557, %v553
      %v559 = vmul.f32 %v544, %v519
      %v560 = vadd.f32 %v452, %v559
      %v561 = vtanh.pop %v560
      %v562 = vsub.f32 1.0, %v558
      %v563 = vmul.f32 %v562, %v561
      %v564 = vmul.f32 %v558, %v453
      %v565 = vadd.f32 %v563, %v564
      %v566 = vstv %s439
      %vm567 = vcmp.lt.s32.totalorder %v566, %v388
      %v568 = vsel %vm567, 1, 0
      %569 = vset.pattern.permute.xlu0 0
      %570 = vperm.xlu0 %569, %v568
      %v571 = vpop.permute.xlu0 %570
      %vm572 = vcmp.eq.s32.totalorder %v571, 1
      %v573 = vsel %vm572, %v565, 0.0
      %s574 = scalar_lea.vmem [#allocation3], %s444
      %575 = vst [vmem:[%s574] sm:$0xff] %v573
      %576 = vst [vmem:[#allocation4] sm:$0xff] %v565
    $region58: #{tpu_custom_call.1} parent=1 // loop_footer
      %s441 = sadd.s32 %s439, 1
    $region59: #{tpu_custom_call.1} parent=1 // loop_footer_branch
      %438 = sbr.rel target = $region55
    $region60: #{tpu_custom_call.1} parent=1 // loop_exit
      _
    %v577 = vld [vmem:[#allocation3] sm:$0xff]
    %v578 = vld [vmem:[#allocation3 + $0x8] sm:$0xff]
    %v579 = vld [vmem:[#allocation3 + $0x10] sm:$0xff]
    %v580 = vld [vmem:[#allocation3 + $0x18] sm:$0xff]
    %v581 = vld [vmem:[#allocation3 + $0x20] sm:$0xff]
    %v582 = vld [vmem:[#allocation3 + $0x28] sm:$0xff]
    %v583 = vld [vmem:[#allocation3 + $0x30] sm:$0xff]
    %v584 = vld [vmem:[#allocation3 + $0x38] sm:$0xff]
    %v585 = vld [vmem:[#allocation12] sm:$0xff]
    %v586 = vld [vmem:[#allocation12 + $0x8] sm:$0xff]
    %v587 = vld [vmem:[#allocation12 + $0x10] sm:$0xff]
    %v588 = vld [vmem:[#allocation12 + $0x18] sm:$0xff]
    %v589 = vld [vmem:[#allocation12 + $0x20] sm:$0xff]
    %v590 = vld [vmem:[#allocation12 + $0x28] sm:$0xff]
    %v591 = vld [vmem:[#allocation12 + $0x30] sm:$0xff]
    %v592 = vld [vmem:[#allocation12 + $0x38] sm:$0xff]
    %v593 = vld [vmem:[#allocation12 + $0x40] sm:$0xff]
    %v594 = vld [vmem:[#allocation12 + $0x48] sm:$0xff]
    %v595 = vld [vmem:[#allocation12 + $0x50] sm:$0xff]
    %v596 = vld [vmem:[#allocation12 + $0x58] sm:$0xff]
    %v597 = vld [vmem:[#allocation12 + $0x60] sm:$0xff]
    %v598 = vld [vmem:[#allocation12 + $0x68] sm:$0xff]
    %v599 = vld [vmem:[#allocation12 + $0x70] sm:$0xff]
    %v600 = vld [vmem:[#allocation12 + $0x78] sm:$0xff]
    %v601 = vld [vmem:[%s10] sm:$0x1]
    %v603 = vperm.slane %v601, 0
    %605 = vmatpush.msra.mxu0 %v600
    %606 = vmatpush.msra.mxu0 %v599
    %607 = vmatpush.msra.mxu0 %v598
    %608 = vmatpush.msra.mxu0 %v597
    %609 = vmatpush.msra.mxu0 %v596
    %610 = vmatpush.msra.mxu0 %v595
    %611 = vmatpush.msra.mxu0 %v594
    %612 = vmatpush.msra.mxu0 %v593
    %613 = vmatpush.msra.mxu0 %v592
    %614 = vmatpush.msra.mxu0 %v591
    %615 = vmatpush.msra.mxu0 %v590
    %616 = vmatpush.msra.mxu0 %v589
    %617 = vmatpush.msra.mxu0 %v588
    %618 = vmatpush.msra.mxu0 %v587
    %619 = vmatpush.msra.mxu0 %v586
    %620 = vmatpush.msra.mxu0 %v585
    %621 = vmatmul.f32.gmra.mxu0 %v577
    %v622 = vpop.f32.mrf.mxu0
    %v623 = vadd.f32 %v603, %v622
    %624 = vmatmul.f32.gmra.mxu0 %v578
    %v625 = vpop.f32.mrf.mxu0
    %v626 = vadd.f32 %v603, %v625
    %627 = vmatmul.f32.gmra.mxu0 %v579
    %v628 = vpop.f32.mrf.mxu0
    %v629 = vadd.f32 %v603, %v628
    %630 = vmatmul.f32.gmra.mxu0 %v580
    %v631 = vpop.f32.mrf.mxu0
    %v632 = vadd.f32 %v603, %v631
    %633 = vmatmul.f32.gmra.mxu0 %v581
    %v634 = vpop.f32.mrf.mxu0
    %v635 = vadd.f32 %v603, %v634
    %636 = vmatmul.f32.gmra.mxu0 %v582
    %v637 = vpop.f32.mrf.mxu0
    %v638 = vadd.f32 %v603, %v637
    %639 = vmatmul.f32.gmra.mxu0 %v583
    %v640 = vpop.f32.mrf.mxu0
    %v641 = vadd.f32 %v603, %v640
    %642 = vmatmul.f32.gmra.mxu0 %v584
    %v643 = vpop.f32.mrf.mxu0
    %v644 = vadd.f32 %v603, %v643
    %645 = vdwg.mxu0
    %646 = vst [vmem:[#allocation13] sm:$0xff] %v623
    %647 = vst [vmem:[#allocation13 + $0x8] sm:$0xff] %v626
    %648 = vst [vmem:[#allocation13 + $0x10] sm:$0xff] %v629
    %649 = vst [vmem:[#allocation13 + $0x18] sm:$0xff] %v632
    %650 = vst [vmem:[#allocation13 + $0x20] sm:$0xff] %v635
    %651 = vst [vmem:[#allocation13 + $0x28] sm:$0xff] %v638
    %652 = vst [vmem:[#allocation13 + $0x30] sm:$0xff] %v641
    %653 = vst [vmem:[#allocation13 + $0x38] sm:$0xff] %v644
    // Predicated region
    $region61: #{tpu_custom_call.1} parent=1 // pred_check
      _
    $region62: #{tpu_custom_call.1} parent=1 // pred_check_branch
      %655 = sbr.rel (0) target = $region64
    $region63: #{tpu_custom_call.1} parent=1 // pred_region
      %657 = vsyncadd [#allocation9], 0
      %s658 = sshll.u32 [#allocation13], 4
      %s659 = int_to_ptr.vmem [resolvable:$true] %s658
      %s660 = sshll.u32 %s11, 4
      %s661 = int_to_ptr.hbm [resolvable:$true] %s660
      %666 = dma.vmem_to_hbm [thread:$0]  %s659, 1024, %s661, [#allocation9], 128, 128, 8
    $region64: #{tpu_custom_call.1} parent=1 // pred_fallthru
      _
    // Predicated region
    $region65: #{tpu_custom_call.1} parent=1 // pred_check
      _
    $region66: #{tpu_custom_call.1} parent=1 // pred_check_branch
      %668 = sbr.rel (0) target = $region68
    $region67: #{tpu_custom_call.1} parent=1 // pred_region
      %670 = dma.done [#allocation9], 1024
    $region68: #{tpu_custom_call.1} parent=1 // pred_fallthru
      _
    %671 = vsyncpa [#allocation8], 1
    %672 = vsyncpa [#allocation11], 1
    %673 = vsyncpa [#allocation9], 1

</llo_original>
